<compile_context>
chip_gen: v7x
topology: tpu7x:2x2x1
jax: 0.10.0
libtpu: 0.0.40
codegen_flags: <defaults>
</compile_context>

<pallas_src>
import functools

import numpy as np

import jax
import jax.numpy as jnp
from jax import lax
from jax.experimental import pallas as pl
from jax.experimental.pallas import tpu as pltpu

EPS = 1e-4            # EDM2 normalize() eps
MP_SILU_DIV = 0.596   # mp_silu(x) = silu(x) / 0.596
RES_BALANCE = 0.3
CLIP_ACT = 256.0


def _mp_silu_ref(v):
    """Reference mp_silu (matches torch: x * sigmoid(x) / 0.596)."""
    return v * jax.nn.sigmoid(v) * (1.0 / MP_SILU_DIV)


def _mp_silu_eup(v):
    """mp_silu with sigmoid written via tanh: sigmoid(v) = 0.5*tanh(v/2) + 0.5.
    Mathematically identical; keeps the transcendental on the EUP slot and avoids
    a VPU divide."""
    return v * (0.5 * jnp.tanh(0.5 * v) + 0.5) * (1.0 / MP_SILU_DIV)


# ---------------------------------------------------------------------------
# Pallas kernel (channels-first: activations are (C, H*W), spatial on lanes)
# ---------------------------------------------------------------------------
def _build_taps_cf(v, first_col, last_col, top, bot, W):
    """Stack the 9 taps of a 3x3 conv (reflection-pad W, zero-pad H) along axis 0.

    v: (C, P) channels-first activation, rows of length W contiguous on the lane
    axis (P = H*W).  Masks are (1, P) booleans built once by the caller.
    Returns a (9*C, P) f32 tensor, tap-major order t = kh*3 + kw, ready to contract
    against a (Cout, 9*C) weight in one MXU matmul.
    """
    C, P = v.shape
    # Width taps (reflection padding): positive-shift lane rotations (XLU).
    left = pltpu.roll(v, 1, axis=1)        # v[h, w-1]  (wrap handled by masks)
    right = pltpu.roll(v, P - 1, axis=1)   # v[h, w+1]
    wtaps = (
        jnp.where(first_col, right, left),   # kw=0: reflect -> v[h, 1] at w == 0
        v,                                   # kw=1
        jnp.where(last_col, left, right),    # kw=2: reflect -> v[h, W-2] at w == W-1
    )
    # Height taps (zero padding): whole-row rotations by +-W, boundary rows zeroed.
    taps = []
    for mask, shift in ((top, W), (None, 0), (bot, P - W)):   # kh = 0, 1, 2
        for wt in wtaps:
            if mask is None:
                taps.append(wt)
            else:
                taps.append(jnp.where(mask, 0.0, pltpu.roll(wt, shift, axis=1)))
    return jnp.concatenate(taps, axis=0)     # (9*C, P)


def block2d_kernel(x_ref, c_ref, w0_ref, w1_ref, wskip_ref, o_ref, *, W):
    Cin, P = x_ref.shape
    x = x_ref[...].astype(jnp.float32)                     # (Cin, P)

    # Boundary masks: built once, at (1, P), shared by both convs.
    pos = lax.broadcasted_iota(jnp.int32, (1, P), 1)
    col = (pos & (W - 1)) if (W & (W - 1)) == 0 else (pos % W)
    first_col = col == 0
    last_col = col == (W - 1)
    top = pos < W                 # h == 0
    bot = pos >= (P - W)          # h == H-1

    # flavor == 'enc': normalize(x, dim=1)  (EDM2 pixel-norm, eps form).
    ss = jnp.sum(x * x, axis=0, keepdims=True)             # (1, P)
    inv = pl.reciprocal(EPS + jnp.sqrt(ss) * (1.0 / np.sqrt(Cin)), approx=True)
    xn = x * inv

    # y = conv_res0(mp_silu(x)) : single MXU matmul over the stacked 9*Cin taps.
    t0 = _build_taps_cf(_mp_silu_eup(xn), first_col, last_col, top, bot, W)
    y = jnp.dot(w0_ref[...], t0.astype(jnp.bfloat16),
                preferred_element_type=jnp.float32)        # (Cmid, P)

    # c = emb_linear(emb, gain=emb_gain) + 1  (precomputed in wrapper, (Cmid, 1)).
    y = _mp_silu_eup(y * c_ref[...].astype(jnp.float32))   # broadcast over lanes

    # y = conv_res1(y) : single MXU matmul over the stacked 9*Cmid taps.
    t1 = _build_taps_cf(y, first_col, last_col, top, bot, W)
    z = jnp.dot(w1_ref[...], t1.astype(jnp.bfloat16),
                preferred_element_type=jnp.float32)        # (Cout, P)

    # x = conv_skip(x)   (1x1 conv == channel matmul)
    xs = jnp.dot(wskip_ref[...], xn.astype(jnp.bfloat16),
                 preferred_element_type=jnp.float32)       # (Cout, P)

    # out = clip(mp_sum(x, y, t), -clip_act, clip_act)   -- f32 epilogue.
    t = RES_BALANCE
    out = (xs * (1.0 - t) + z * t) * (1.0 / np.sqrt((1.0 - t) ** 2 + t ** 2))
    o_ref[...] = jnp.clip(out, -CLIP_ACT, CLIP_ACT).astype(o_ref.dtype)


# ---------------------------------------------------------------------------
# Wrapper (NCHW in / NCHW out, like the PyTorch module; no transposes of x)
# ---------------------------------------------------------------------------
@jax.jit
def block2d_forward(x_nchw, emb_nc11, w0_oihw, w1_oihw, wskip, wemb):
    """x: (B, Cin, H, W); emb: (B, Cemb, 1, 1).
    w0/w1: effective 3x3 conv weights (OIHW), wskip: (Cout, Cin), wemb: (Cmid, Cemb)
    with emb_gain already folded in.  Returns (B, Cout, H, W)."""
    B, Cin, H, W = x_nchw.shape
    assert W >= 2, "width reflection padding needs W >= 2"
    Cmid = w0_oihw.shape[0]
    Cout = w1_oihw.shape[0]
    P = H * W

    # Free metadata reshape: NCHW is already channels-first; just collapse (H, W).
    x_flat = x_nchw.reshape(B, Cin, P)

    # Hoisted embedding modulation (tiny, per-batch, spatially invariant).
    c = emb_nc11.reshape(B, -1) @ wemb.T + 1.0                       # (B, Cmid)
    c = c.reshape(B, Cmid, 1).astype(jnp.float32)

    # Conv weights flattened for the tap-stacked matmuls:
    # (O, I, KH, KW) -> (O, KH, KW, I) -> (O, 9*I), column = (kh*3 + kw)*I + ci,
    # matching the kernel's tap concat order.  Fed to the MXU in bf16.
    w0_flat = jnp.transpose(w0_oihw, (0, 2, 3, 1)).reshape(Cmid, 9 * Cin)
    w1_flat = jnp.transpose(w1_oihw, (0, 2, 3, 1)).reshape(Cout, 9 * Cmid)
    w0_flat = w0_flat.astype(jnp.bfloat16)
    w1_flat = w1_flat.astype(jnp.bfloat16)
    wskip_bf = wskip.astype(jnp.bfloat16)

    # Cheap scheduling hint for XLA around the custom call.
    mxu_flops = 2 * B * P * (Cmid * 9 * Cin + Cout * 9 * Cmid + Cout * Cin)
    vpu_flops = 12 * B * P * (Cin + 2 * Cmid + Cout)
    ce = pl.CostEstimate(
        flops=mxu_flops + vpu_flops,
        transcendentals=B * P * (2 + Cin + Cmid),
        bytes_accessed=4 * (x_flat.size + B * Cout * P + c.size)
        + 2 * (w0_flat.size + w1_flat.size + wskip_bf.size),
    )

    kernel = functools.partial(block2d_kernel, W=W)
    out_flat = pl.pallas_call(
        kernel,
        out_shape=jax.ShapeDtypeStruct((B, Cout, P), x_nchw.dtype),
        grid=(B,),
        in_specs=[
            pl.BlockSpec((None, Cin, P), lambda b: (b, 0, 0)),       # x, lane-dense
            pl.BlockSpec((None, Cmid, 1), lambda b: (b, 0, 0)),      # c (per-channel)
            pl.BlockSpec((Cmid, 9 * Cin), lambda b: (0, 0)),         # conv_res0 weight
            pl.BlockSpec((Cout, 9 * Cmid), lambda b: (0, 0)),        # conv_res1 weight
            pl.BlockSpec((Cout, Cin), lambda b: (0, 0)),             # conv_skip weight
        ],
        out_specs=pl.BlockSpec((None, Cout, P), lambda b: (b, 0, 0)),
        compiler_params=pltpu.CompilerParams(dimension_semantics=("parallel",)),
        cost_estimate=ce,
    )(x_flat, c, w0_flat, w1_flat, wskip_bf)

    return out_flat.reshape(B, Cout, H, W)


# ---------------------------------------------------------------------------
# Deterministic parameter setup (MPConv2D semantics, training=True)
# ---------------------------------------------------------------------------
def mp_conv2d_weight(key, out_ch, in_ch, kh, kw, gain=1.0, training=True):
    """torch.randn(out, in, kh, kw) -> effective conv weight (OIHW)."""
    w = jax.random.normal(key, (out_ch, in_ch, kh, kw), jnp.float32)
    fan = in_ch * kh * kw
    if training:
        # EDM2 normalize(w): per-output-channel forced weight norm.
        n = jnp.sqrt(jnp.sum(w * w, axis=(1, 2, 3), keepdims=True))
        w = w / (EPS + n / np.sqrt(fan))
    return w * (gain / np.sqrt(fan))


# ---------------------------------------------------------------------------
# Pure-JAX reference (NCHW, f32, HIGHEST precision) for correctness check
# ---------------------------------------------------------------------------
def reference_forward_nchw(x, emb, w0_oihw, w1_oihw, wskip, wemb):
    Cin = x.shape[1]
    norm = jnp.sqrt(jnp.sum(x * x, axis=1, keepdims=True))
    xn = x / (EPS + norm / np.sqrt(Cin))

    def pad(v):   # reflection pad W by 1, zero pad H by 1
        v = jnp.pad(v, ((0, 0), (0, 0), (0, 0), (1, 1)), mode="reflect")
        return jnp.pad(v, ((0, 0), (0, 0), (1, 1), (0, 0)))

    dn = ("NCHW", "OIHW", "NCHW")
    y = lax.conv_general_dilated(pad(_mp_silu_ref(xn)), w0_oihw, (1, 1), "VALID",
                                 dimension_numbers=dn,
                                 precision=lax.Precision.HIGHEST)
    c = emb.reshape(emb.shape[0], -1) @ wemb.T + 1.0
    y = _mp_silu_ref(y * c[:, :, None, None])
    y = lax.conv_general_dilated(pad(y), w1_oihw, (1, 1), "VALID",
                                 dimension_numbers=dn,
                                 precision=lax.Precision.HIGHEST)
    xs = jnp.einsum("oc,bchw->bohw", wskip, xn, precision=lax.Precision.HIGHEST)
    t = RES_BALANCE
    out = (xs * (1.0 - t) + y * t) / np.sqrt((1.0 - t) ** 2 + t ** 2)
    return jnp.clip(out, -CLIP_ACT, CLIP_ACT)


if __name__ == "__main__":
    # Block2D(level=0, in_channels=4, out_channels=8, emb_channels=16,
    #         flavor='enc', mlp_multiplier=2, mlp_groups=1, kernel=(3,3))
    B, Cin, Cout, Cemb = 2, 4, 8, 16
    mlp_multiplier = 2
    Cmid = Cout * mlp_multiplier
    H = W = 16

    key = jax.random.PRNGKey(0)
    kx, ke, k0, k1, k2, k3 = jax.random.split(key, 6)

    x = jax.random.normal(kx, (B, Cin, H, W), jnp.float32)      # NCHW like PyTorch
    emb = jax.random.normal(ke, (B, Cemb, 1, 1), jnp.float32)   # NCHW, 1x1 spatial

    # emb_gain is a learned scalar (initialised to 0 in the module); use a nonzero
    # value here so the modulation path is actually exercised by the check.
    emb_gain = 0.5
    w0 = mp_conv2d_weight(k0, Cmid, Cin, 3, 3)                          # (Cmid,Cin,3,3)
    w1 = mp_conv2d_weight(k1, Cout, Cmid, 3, 3)                         # (Cout,Cmid,3,3)
    wskip = mp_conv2d_weight(k2, Cout, Cin, 1, 1)[:, :, 0, 0]           # (Cout,Cin)
    wemb = mp_conv2d_weight(k3, Cmid, Cemb, 1, 1, gain=emb_gain)[:, :, 0, 0]  # (Cmid,Cemb)

    out = block2d_forward(x, emb, w0, w1, wskip, wemb)
    out = jax.block_until_ready(out)

    ref = reference_forward_nchw(x, emb, w0, w1, wskip, wemb)
    # bf16 MXU feed + approx reciprocal: tolerance relaxed vs the pure-f32 version.
    np.testing.assert_allclose(np.asarray(out), np.asarray(ref),
                               rtol=3e-2, atol=3e-2)
    print("KERNEL_OK")
</pallas_src>

<mosaic_0001>
module attributes {stable_mosaic.version = 11 : i64} {
  func.func @block2d_kernel(%arg0: i32, %arg1: memref<1x4x256xf32, #tpu.memory_space<vmem>>, %arg2: memref<1x16x1xf32, #tpu.memory_space<vmem>>, %arg3: memref<16x36xbf16, #tpu.memory_space<vmem>>, %arg4: memref<8x144xbf16, #tpu.memory_space<vmem>>, %arg5: memref<8x4xbf16, #tpu.memory_space<vmem>>, %arg6: memref<1x8x256xf32, #tpu.memory_space<vmem>>) attributes {dimension_semantics = [#tpu.dimension_semantics<parallel>], iteration_bounds = array<i64: 2>, scalar_prefetch = 0 : i64, scratch_operands = 0 : i64, tpu.core_type = #tpu.core_type<tc>, window_params = [{transform_indices = @transform_0, window_bounds = array<i64: 1, 4, 256>}, {transform_indices = @transform_1, window_bounds = array<i64: 1, 16, 1>}, {pipeline_mode = #tpu.pipeline_mode<synchronous>, transform_indices = @transform_2, window_bounds = array<i64: 16, 36>}, {pipeline_mode = #tpu.pipeline_mode<synchronous>, transform_indices = @transform_3, window_bounds = array<i64: 8, 144>}, {pipeline_mode = #tpu.pipeline_mode<synchronous>, transform_indices = @transform_4, window_bounds = array<i64: 8, 4>}, {transform_indices = @transform_5, window_bounds = array<i64: 1, 8, 256>}]} {
    %c0 = arith.constant 0 : index
    %c0_0 = arith.constant 0 : index
    %c0_1 = arith.constant 0 : index
    %0 = vector.load %arg1[%c0, %c0_0, %c0_1] : memref<1x4x256xf32, #tpu.memory_space<vmem>>, vector<1x4x256xf32>
    %1 = vector.shape_cast %0 : vector<1x4x256xf32> to vector<4x256xf32>
    %2 = tpu.iota {dimensions = array<i32: 1>} : vector<1x256xi32>
    %c15_i32 = arith.constant 15 : i32
    %3 = vector.broadcast %c15_i32 : i32 to vector<1x256xi32>
    %4 = arith.andi %2, %3 : vector<1x256xi32>
    %c0_i32 = arith.constant 0 : i32
    %5 = vector.broadcast %c0_i32 : i32 to vector<1x256xi32>
    %6 = arith.cmpi eq, %4, %5 : vector<1x256xi32>
    %c15_i32_2 = arith.constant 15 : i32
    %7 = vector.broadcast %c15_i32_2 : i32 to vector<1x256xi32>
    %8 = arith.cmpi eq, %4, %7 : vector<1x256xi32>
    %c16_i32 = arith.constant 16 : i32
    %9 = vector.broadcast %c16_i32 : i32 to vector<1x256xi32>
    %10 = arith.cmpi slt, %2, %9 : vector<1x256xi32>
    %c240_i32 = arith.constant 240 : i32
    %11 = vector.broadcast %c240_i32 : i32 to vector<1x256xi32>
    %12 = arith.cmpi sge, %2, %11 : vector<1x256xi32>
    %13 = arith.mulf %1, %1 : vector<4x256xf32>
    %cst = arith.constant dense<0.000000e+00> : vector<256xf32>
    %14 = vector.multi_reduction <add>, %13, %cst [0] : vector<4x256xf32> to vector<256xf32>
    %15 = vector.shape_cast %14 : vector<256xf32> to vector<1x256xf32>
    %16 = math.sqrt %15 : vector<1x256xf32>
    %cst_3 = arith.constant 5.000000e-01 : f32
    %17 = vector.broadcast %cst_3 : f32 to vector<1x256xf32>
    %18 = arith.mulf %16, %17 : vector<1x256xf32>
    %cst_4 = arith.constant 9.99999974E-5 : f32
    %19 = vector.broadcast %cst_4 : f32 to vector<1x256xf32>
    %20 = arith.addf %19, %18 : vector<1x256xf32>
    %21 = tpu.reciprocal %20 {approx = true} : vector<1x256xf32> -> vector<1x256xf32>
    %22 = vector.broadcast %21 : vector<1x256xf32> to vector<4x256xf32>
    %23 = arith.mulf %1, %22 : vector<4x256xf32>
    %cst_5 = arith.constant 5.000000e-01 : f32
    %24 = vector.broadcast %cst_5 : f32 to vector<4x256xf32>
    %25 = arith.mulf %24, %23 : vector<4x256xf32>
    %26 = math.tanh %25 : vector<4x256xf32>
    %cst_6 = arith.constant 5.000000e-01 : f32
    %27 = vector.broadcast %cst_6 : f32 to vector<4x256xf32>
    %28 = arith.mulf %27, %26 : vector<4x256xf32>
    %cst_7 = arith.constant 5.000000e-01 : f32
    %29 = vector.broadcast %cst_7 : f32 to vector<4x256xf32>
    %30 = arith.addf %28, %29 : vector<4x256xf32>
    %31 = arith.mulf %23, %30 : vector<4x256xf32>
    %cst_8 = arith.constant 1.67785239 : f32
    %32 = vector.broadcast %cst_8 : f32 to vector<4x256xf32>
    %33 = arith.mulf %31, %32 : vector<4x256xf32>
    %c1_i32 = arith.constant 1 : i32
    %34 = tpu.dynamic_rotate %33 by %c1_i32 dim 1 : vector<4x256xf32>, i32 -> vector<4x256xf32>
    %c255_i32 = arith.constant 255 : i32
    %35 = tpu.dynamic_rotate %33 by %c255_i32 dim 1 : vector<4x256xf32>, i32 -> vector<4x256xf32>
    %36 = vector.shape_cast %6 : vector<1x256xi1> to vector<1x256xi1>
    %37 = vector.broadcast %36 : vector<1x256xi1> to vector<4x256xi1>
    %38 = arith.select %37, %35, %34 : vector<4x256xi1>, vector<4x256xf32>
    %39 = vector.shape_cast %8 : vector<1x256xi1> to vector<1x256xi1>
    %40 = vector.broadcast %39 : vector<1x256xi1> to vector<4x256xi1>
    %41 = arith.select %40, %34, %35 : vector<4x256xi1>, vector<4x256xf32>
    %c16_i32_9 = arith.constant 16 : i32
    %42 = tpu.dynamic_rotate %38 by %c16_i32_9 dim 1 : vector<4x256xf32>, i32 -> vector<4x256xf32>
    %cst_10 = arith.constant 0.000000e+00 : f32
    %43 = vector.shape_cast %10 : vector<1x256xi1> to vector<1x256xi1>
    %44 = vector.broadcast %43 : vector<1x256xi1> to vector<4x256xi1>
    %45 = vector.broadcast %cst_10 : f32 to vector<4x256xf32>
    %46 = arith.select %44, %45, %42 : vector<4x256xi1>, vector<4x256xf32>
    %c16_i32_11 = arith.constant 16 : i32
    %47 = tpu.dynamic_rotate %33 by %c16_i32_11 dim 1 : vector<4x256xf32>, i32 -> vector<4x256xf32>
    %cst_12 = arith.constant 0.000000e+00 : f32
    %48 = vector.shape_cast %10 : vector<1x256xi1> to vector<1x256xi1>
    %49 = vector.broadcast %48 : vector<1x256xi1> to vector<4x256xi1>
    %50 = vector.broadcast %cst_12 : f32 to vector<4x256xf32>
    %51 = arith.select %49, %50, %47 : vector<4x256xi1>, vector<4x256xf32>
    %c16_i32_13 = arith.constant 16 : i32
    %52 = tpu.dynamic_rotate %41 by %c16_i32_13 dim 1 : vector<4x256xf32>, i32 -> vector<4x256xf32>
    %cst_14 = arith.constant 0.000000e+00 : f32
    %53 = vector.shape_cast %10 : vector<1x256xi1> to vector<1x256xi1>
    %54 = vector.broadcast %53 : vector<1x256xi1> to vector<4x256xi1>
    %55 = vector.broadcast %cst_14 : f32 to vector<4x256xf32>
    %56 = arith.select %54, %55, %52 : vector<4x256xi1>, vector<4x256xf32>
    %c240_i32_15 = arith.constant 240 : i32
    %57 = tpu.dynamic_rotate %38 by %c240_i32_15 dim 1 : vector<4x256xf32>, i32 -> vector<4x256xf32>
    %cst_16 = arith.constant 0.000000e+00 : f32
    %58 = vector.shape_cast %12 : vector<1x256xi1> to vector<1x256xi1>
    %59 = vector.broadcast %58 : vector<1x256xi1> to vector<4x256xi1>
    %60 = vector.broadcast %cst_16 : f32 to vector<4x256xf32>
    %61 = arith.select %59, %60, %57 : vector<4x256xi1>, vector<4x256xf32>
    %c240_i32_17 = arith.constant 240 : i32
    %62 = tpu.dynamic_rotate %33 by %c240_i32_17 dim 1 : vector<4x256xf32>, i32 -> vector<4x256xf32>
    %cst_18 = arith.constant 0.000000e+00 : f32
    %63 = vector.shape_cast %12 : vector<1x256xi1> to vector<1x256xi1>
    %64 = vector.broadcast %63 : vector<1x256xi1> to vector<4x256xi1>
    %65 = vector.broadcast %cst_18 : f32 to vector<4x256xf32>
    %66 = arith.select %64, %65, %62 : vector<4x256xi1>, vector<4x256xf32>
    %c240_i32_19 = arith.constant 240 : i32
    %67 = tpu.dynamic_rotate %41 by %c240_i32_19 dim 1 : vector<4x256xf32>, i32 -> vector<4x256xf32>
    %cst_20 = arith.constant 0.000000e+00 : f32
    %68 = vector.shape_cast %12 : vector<1x256xi1> to vector<1x256xi1>
    %69 = vector.broadcast %68 : vector<1x256xi1> to vector<4x256xi1>
    %70 = vector.broadcast %cst_20 : f32 to vector<4x256xf32>
    %71 = arith.select %69, %70, %67 : vector<4x256xi1>, vector<4x256xf32>
    %72 = tpu.concatenate %46, %51, %56, %38, %33, %41, %61, %66, %71 in 0 : vector<4x256xf32>, vector<4x256xf32>, vector<4x256xf32>, vector<4x256xf32>, vector<4x256xf32>, vector<4x256xf32>, vector<4x256xf32>, vector<4x256xf32>, vector<4x256xf32> -> vector<36x256xf32>
    %c0_21 = arith.constant 0 : index
    %c0_22 = arith.constant 0 : index
    %73 = vector.load %arg3[%c0_21, %c0_22] : memref<16x36xbf16, #tpu.memory_space<vmem>>, vector<16x36xbf16>
    %74 = arith.truncf %72 : vector<36x256xf32> to vector<36x256xbf16>
    %cst_23 = arith.constant dense<0.000000e+00> : vector<16x256xf32>
    %75 = tpu.matmul %73, %74, %cst_23 {dimension_numbers = #tpu.dot_dimension_numbers<[1], [0], [0], [1], [0, 0, 1, 1], [], []>} : vector<16x36xbf16>, vector<36x256xbf16>, vector<16x256xf32> -> vector<16x256xf32>
    %c0_24 = arith.constant 0 : index
    %c0_25 = arith.constant 0 : index
    %c0_26 = arith.constant 0 : index
    %76 = vector.load %arg2[%c0_24, %c0_25, %c0_26] : memref<1x16x1xf32, #tpu.memory_space<vmem>>, vector<1x16x1xf32>
    %77 = vector.shape_cast %76 : vector<1x16x1xf32> to vector<16x1xf32>
    %78 = vector.broadcast %77 : vector<16x1xf32> to vector<16x256xf32>
    %79 = arith.mulf %75, %78 : vector<16x256xf32>
    %cst_27 = arith.constant 5.000000e-01 : f32
    %80 = vector.broadcast %cst_27 : f32 to vector<16x256xf32>
    %81 = arith.mulf %80, %79 : vector<16x256xf32>
    %82 = math.tanh %81 : vector<16x256xf32>
    %cst_28 = arith.constant 5.000000e-01 : f32
    %83 = vector.broadcast %cst_28 : f32 to vector<16x256xf32>
    %84 = arith.mulf %83, %82 : vector<16x256xf32>
    %cst_29 = arith.constant 5.000000e-01 : f32
    %85 = vector.broadcast %cst_29 : f32 to vector<16x256xf32>
    %86 = arith.addf %84, %85 : vector<16x256xf32>
    %87 = arith.mulf %79, %86 : vector<16x256xf32>
    %cst_30 = arith.constant 1.67785239 : f32
    %88 = vector.broadcast %cst_30 : f32 to vector<16x256xf32>
    %89 = arith.mulf %87, %88 : vector<16x256xf32>
    %c1_i32_31 = arith.constant 1 : i32
    %90 = tpu.dynamic_rotate %89 by %c1_i32_31 dim 1 : vector<16x256xf32>, i32 -> vector<16x256xf32>
    %c255_i32_32 = arith.constant 255 : i32
    %91 = tpu.dynamic_rotate %89 by %c255_i32_32 dim 1 : vector<16x256xf32>, i32 -> vector<16x256xf32>
    %92 = vector.shape_cast %6 : vector<1x256xi1> to vector<1x256xi1>
    %93 = vector.broadcast %92 : vector<1x256xi1> to vector<16x256xi1>
    %94 = arith.select %93, %91, %90 : vector<16x256xi1>, vector<16x256xf32>
    %95 = vector.shape_cast %8 : vector<1x256xi1> to vector<1x256xi1>
    %96 = vector.broadcast %95 : vector<1x256xi1> to vector<16x256xi1>
    %97 = arith.select %96, %90, %91 : vector<16x256xi1>, vector<16x256xf32>
    %c16_i32_33 = arith.constant 16 : i32
    %98 = tpu.dynamic_rotate %94 by %c16_i32_33 dim 1 : vector<16x256xf32>, i32 -> vector<16x256xf32>
    %cst_34 = arith.constant 0.000000e+00 : f32
    %99 = vector.shape_cast %10 : vector<1x256xi1> to vector<1x256xi1>
    %100 = vector.broadcast %99 : vector<1x256xi1> to vector<16x256xi1>
    %101 = vector.broadcast %cst_34 : f32 to vector<16x256xf32>
    %102 = arith.select %100, %101, %98 : vector<16x256xi1>, vector<16x256xf32>
    %c16_i32_35 = arith.constant 16 : i32
    %103 = tpu.dynamic_rotate %89 by %c16_i32_35 dim 1 : vector<16x256xf32>, i32 -> vector<16x256xf32>
    %cst_36 = arith.constant 0.000000e+00 : f32
    %104 = vector.shape_cast %10 : vector<1x256xi1> to vector<1x256xi1>
    %105 = vector.broadcast %104 : vector<1x256xi1> to vector<16x256xi1>
    %106 = vector.broadcast %cst_36 : f32 to vector<16x256xf32>
    %107 = arith.select %105, %106, %103 : vector<16x256xi1>, vector<16x256xf32>
    %c16_i32_37 = arith.constant 16 : i32
    %108 = tpu.dynamic_rotate %97 by %c16_i32_37 dim 1 : vector<16x256xf32>, i32 -> vector<16x256xf32>
    %cst_38 = arith.constant 0.000000e+00 : f32
    %109 = vector.shape_cast %10 : vector<1x256xi1> to vector<1x256xi1>
    %110 = vector.broadcast %109 : vector<1x256xi1> to vector<16x256xi1>
    %111 = vector.broadcast %cst_38 : f32 to vector<16x256xf32>
    %112 = arith.select %110, %111, %108 : vector<16x256xi1>, vector<16x256xf32>
    %c240_i32_39 = arith.constant 240 : i32
    %113 = tpu.dynamic_rotate %94 by %c240_i32_39 dim 1 : vector<16x256xf32>, i32 -> vector<16x256xf32>
    %cst_40 = arith.constant 0.000000e+00 : f32
    %114 = vector.shape_cast %12 : vector<1x256xi1> to vector<1x256xi1>
    %115 = vector.broadcast %114 : vector<1x256xi1> to vector<16x256xi1>
    %116 = vector.broadcast %cst_40 : f32 to vector<16x256xf32>
    %117 = arith.select %115, %116, %113 : vector<16x256xi1>, vector<16x256xf32>
    %c240_i32_41 = arith.constant 240 : i32
    %118 = tpu.dynamic_rotate %89 by %c240_i32_41 dim 1 : vector<16x256xf32>, i32 -> vector<16x256xf32>
    %cst_42 = arith.constant 0.000000e+00 : f32
    %119 = vector.shape_cast %12 : vector<1x256xi1> to vector<1x256xi1>
    %120 = vector.broadcast %119 : vector<1x256xi1> to vector<16x256xi1>
    %121 = vector.broadcast %cst_42 : f32 to vector<16x256xf32>
    %122 = arith.select %120, %121, %118 : vector<16x256xi1>, vector<16x256xf32>
    %c240_i32_43 = arith.constant 240 : i32
    %123 = tpu.dynamic_rotate %97 by %c240_i32_43 dim 1 : vector<16x256xf32>, i32 -> vector<16x256xf32>
    %cst_44 = arith.constant 0.000000e+00 : f32
    %124 = vector.shape_cast %12 : vector<1x256xi1> to vector<1x256xi1>
    %125 = vector.broadcast %124 : vector<1x256xi1> to vector<16x256xi1>
    %126 = vector.broadcast %cst_44 : f32 to vector<16x256xf32>
    %127 = arith.select %125, %126, %123 : vector<16x256xi1>, vector<16x256xf32>
    %128 = tpu.concatenate %102, %107, %112, %94, %89, %97, %117, %122, %127 in 0 : vector<16x256xf32>, vector<16x256xf32>, vector<16x256xf32>, vector<16x256xf32>, vector<16x256xf32>, vector<16x256xf32>, vector<16x256xf32>, vector<16x256xf32>, vector<16x256xf32> -> vector<144x256xf32>
    %c0_45 = arith.constant 0 : index
    %c0_46 = arith.constant 0 : index
    %129 = vector.load %arg4[%c0_45, %c0_46] : memref<8x144xbf16, #tpu.memory_space<vmem>>, vector<8x144xbf16>
    %130 = arith.truncf %128 : vector<144x256xf32> to vector<144x256xbf16>
    %cst_47 = arith.constant dense<0.000000e+00> : vector<8x256xf32>
    %131 = tpu.matmul %129, %130, %cst_47 {dimension_numbers = #tpu.dot_dimension_numbers<[1], [0], [0], [1], [0, 0, 1, 1], [], []>} : vector<8x144xbf16>, vector<144x256xbf16>, vector<8x256xf32> -> vector<8x256xf32>
    %c0_48 = arith.constant 0 : index
    %c0_49 = arith.constant 0 : index
    %132 = vector.load %arg5[%c0_48, %c0_49] : memref<8x4xbf16, #tpu.memory_space<vmem>>, vector<8x4xbf16>
    %133 = arith.truncf %23 : vector<4x256xf32> to vector<4x256xbf16>
    %cst_50 = arith.constant dense<0.000000e+00> : vector<8x256xf32>
    %134 = tpu.matmul %132, %133, %cst_50 {dimension_numbers = #tpu.dot_dimension_numbers<[1], [0], [0], [1], [0, 0, 1, 1], [], []>} : vector<8x4xbf16>, vector<4x256xbf16>, vector<8x256xf32> -> vector<8x256xf32>
    %cst_51 = arith.constant 0.699999988 : f32
    %135 = vector.broadcast %cst_51 : f32 to vector<8x256xf32>
    %136 = arith.mulf %134, %135 : vector<8x256xf32>
    %cst_52 = arith.constant 3.000000e-01 : f32
    %137 = vector.broadcast %cst_52 : f32 to vector<8x256xf32>
    %138 = arith.mulf %131, %137 : vector<8x256xf32>
    %139 = arith.addf %136, %138 : vector<8x256xf32>
    %cst_53 = arith.constant 1.31306434 : f32
    %140 = vector.broadcast %cst_53 : f32 to vector<8x256xf32>
    %141 = arith.mulf %139, %140 : vector<8x256xf32>
    %cst_54 = arith.constant -2.560000e+02 : f32
    %cst_55 = arith.constant 2.560000e+02 : f32
    %142 = vector.broadcast %cst_54 : f32 to vector<8x256xf32>
    %143 = arith.maximumf %142, %141 : vector<8x256xf32>
    %144 = vector.broadcast %cst_55 : f32 to vector<8x256xf32>
    %145 = arith.minimumf %144, %143 : vector<8x256xf32>
    %c0_56 = arith.constant 0 : index
    %c0_57 = arith.constant 0 : index
    %c0_58 = arith.constant 0 : index
    %146 = vector.load %arg6[%c0_56, %c0_57, %c0_58] : memref<1x8x256xf32, #tpu.memory_space<vmem>>, vector<1x8x256xf32>
    %147 = vector.shape_cast %146 : vector<1x8x256xf32> to vector<8x256xf32>
    %148 = vector.shape_cast %145 : vector<8x256xf32> to vector<1x8x256xf32>
    tpu.vector_store %arg6[%c0_56, %c0_57, %c0_58], %148 {strides = array<i32>} : memref<1x8x256xf32, #tpu.memory_space<vmem>>, vector<1x8x256xf32>,
    return
  }
  func.func @transform_0(%arg0: i32) -> (i32, i32, i32) {
    %c0_i32 = arith.constant 0 : i32
    %c0_i32_0 = arith.constant 0 : i32
    %c0_i32_1 = arith.constant 0 : i32
    return %arg0, %c0_i32, %c0_i32_0 : i32, i32, i32
  }
  func.func @transform_1(%arg0: i32) -> (i32, i32, i32) {
    %c0_i32 = arith.constant 0 : i32
    %c0_i32_0 = arith.constant 0 : i32
    %c0_i32_1 = arith.constant 0 : i32
    return %arg0, %c0_i32, %c0_i32_0 : i32, i32, i32
  }
  func.func @transform_2(%arg0: i32) -> (i32, i32) {
    %c0_i32 = arith.constant 0 : i32
    %c0_i32_0 = arith.constant 0 : i32
    %c0_i32_1 = arith.constant 0 : i32
    return %c0_i32, %c0_i32_0 : i32, i32
  }
  func.func @transform_3(%arg0: i32) -> (i32, i32) {
    %c0_i32 = arith.constant 0 : i32
    %c0_i32_0 = arith.constant 0 : i32
    %c0_i32_1 = arith.constant 0 : i32
    return %c0_i32, %c0_i32_0 : i32, i32
  }
  func.func @transform_4(%arg0: i32) -> (i32, i32) {
    %c0_i32 = arith.constant 0 : i32
    %c0_i32_0 = arith.constant 0 : i32
    %c0_i32_1 = arith.constant 0 : i32
    return %c0_i32, %c0_i32_0 : i32, i32
  }
  func.func @transform_5(%arg0: i32) -> (i32, i32, i32) {
    %c0_i32 = arith.constant 0 : i32
    %c0_i32_0 = arith.constant 0 : i32
    %c0_i32_1 = arith.constant 0 : i32
    return %arg0, %c0_i32, %c0_i32_0 : i32, i32, i32
  }
}

</mosaic_0001>

<llo_original>
// kernel: block2d_forward.1
$region0: #{block2d_forward.1}
  #allocation0 [shape = 'u32[]', space=smem, size = 0x4, offset = 0x4, fixed_abs, tag = 'smem constant byte address 0x4 - core index']
  #allocation1 [shape = 'u32[144,128]{1,0:T(1,128)}', space=vmem, size = 0x12000, scoped, tag = 'internal scratch']
  %s0 = inlined_call_operand.vmem [shape: f32[2,4,256], index: 0, kind: input, shape index: {}]
  %s1 = inlined_call_operand.vmem [shape: f32[2,16,1], index: 1, kind: input, shape index: {}]
  %s2 = inlined_call_operand.vmem [shape: bf16[16,36], index: 2, kind: input, shape index: {}]
  %s3 = inlined_call_operand.vmem [shape: bf16[8,144], index: 3, kind: input, shape index: {}]
  %s4 = inlined_call_operand.vmem [shape: bf16[8,4], index: 4, kind: input, shape index: {}]
  %s5 = inlined_call_operand.vmem [shape: f32[2,8,256], index: 5, kind: output, shape index: {}]
  %s6 = sld [smem:[#allocation0]]
  $region53: #{block2d_forward.1} parent=0
    _
  %s8 = ssub.s32 1, %s6
  %s9 = scalar_select 0, %s8, %s6
  loop: start=0, step=1, limit=4
  $region2: #{block2d_forward.1} parent=0 // loop_pre_header
    _
  $region3: #{block2d_forward.1} parent=0 // loop_header
    %s11 = sphi 0, %s15
    %p12 = scmp.ge.s32.totalorder %s11, 4
    %s21 = sphi 0, %s23
    %s24 = sphi 0, %s21
    %s25 = sphi 0, %s24
    %s41 = sphi 0, %s25
    %s47 = sphi 0, %s49
    %s50 = sphi 0, %s47
    %s51 = sphi 0, %s50
    %s67 = sphi 0, %s51
    %s71 = sphi 0, %s71
    %s73 = sphi 0, %s71
    %s74 = sphi 0, %s73
    %s88 = sphi 0, %s74
    %s92 = sphi 0, %s92
    %s94 = sphi 0, %s92
    %s95 = sphi 0, %s94
    %s109 = sphi 0, %s95
    %s113 = sphi 0, %s113
    %s115 = sphi 0, %s113
    %s116 = sphi 0, %s115
    %s130 = sphi 0, %s116
    %s136 = sphi 0, %s138
    %s139 = sphi 0, %s136
    %s140 = sphi 0, %s139
    %s156 = sphi 0, %s140
  $region4: #{block2d_forward.1} parent=0 // loop_header_branch
    %14 = sbr.rel (%p12) target = $region8
  $region5: #{block2d_forward.1} parent=0 // loop_body
    %s16 = ssub.s32 %s11, 1
    %s17 = ssub.s32 %s11, 2
    %s18 = sadd.s32 %s11, 1
    %s19 = ssub.s32 %s11, %s18
    %p20 = scmp.eq.s32.totalorder %s19, 0
    %s22 = sadd.s32 %s21, 1
    %s23 = scalar_select %p20, %s21, %s22
    %p26 = pneg %p20
    %p27 = scmp.eq.s32.totalorder %s11, 1
    %p28 = por %p26, %p27
    %p29 = scmp.ne.s32.totalorder %s21, %s24
    %p30 = scmp.eq.s32.totalorder %s11, 0
    %p31 = por %p29, %p30
    %p32 = scmp.ne.s32.totalorder %s21, %s24
    %p33 = scmp.eq.s32.totalorder %s16, 1
    %p34 = por %p32, %p33
    %p35 = scmp.ne.s32.totalorder %s24, %s25
    %p36 = scmp.eq.s32.totalorder %s16, 0
    %p37 = por %p35, %p36
    %p38 = scmp.ne.s32.totalorder %s24, %s25
    %p39 = scmp.eq.s32.totalorder %s17, 1
    %p40 = por %p38, %p39
    %p42 = scmp.ne.s32.totalorder %s25, %s41
    %p43 = scmp.eq.s32.totalorder %s17, 0
    %p44 = por %p42, %p43
    %s45 = ssub.s32 %s11, %s18
    %p46 = scmp.eq.s32.totalorder %s45, 0
    %s48 = sadd.s32 %s47, 1
    %s49 = scalar_select %p46, %s47, %s48
    %p52 = pneg %p46
    %p53 = scmp.eq.s32.totalorder %s11, 1
    %p54 = por %p52, %p53
    %p55 = scmp.ne.s32.totalorder %s47, %s50
    %p56 = scmp.eq.s32.totalorder %s11, 0
    %p57 = por %p55, %p56
    %p58 = scmp.ne.s32.totalorder %s47, %s50
    %p59 = scmp.eq.s32.totalorder %s16, 1
    %p60 = por %p58, %p59
    %p61 = scmp.ne.s32.totalorder %s50, %s51
    %p62 = scmp.eq.s32.totalorder %s16, 0
    %p63 = por %p61, %p62
    %p64 = scmp.ne.s32.totalorder %s50, %s51
    %p65 = scmp.eq.s32.totalorder %s17, 1
    %p66 = por %p64, %p65
    %p68 = scmp.ne.s32.totalorder %s51, %s67
    %p69 = scmp.eq.s32.totalorder %s17, 0
    %p70 = por %p68, %p69
    %s72 = sadd.s32 %s71, 1
    %p75 = scmp.eq.s32.totalorder %s11, 1
    %p76 = scmp.ne.s32.totalorder %s71, %s73
    %p77 = scmp.eq.s32.totalorder %s11, 0
    %p78 = por %p76, %p77
    %p79 = scmp.ne.s32.totalorder %s71, %s73
    %p80 = scmp.eq.s32.totalorder %s16, 1
    %p81 = por %p79, %p80
    %p82 = scmp.ne.s32.totalorder %s73, %s74
    %p83 = scmp.eq.s32.totalorder %s16, 0
    %p84 = por %p82, %p83
    %p85 = scmp.ne.s32.totalorder %s73, %s74
    %p86 = scmp.eq.s32.totalorder %s17, 1
    %p87 = por %p85, %p86
    %p89 = scmp.ne.s32.totalorder %s74, %s88
    %p90 = scmp.eq.s32.totalorder %s17, 0
    %p91 = por %p89, %p90
    %s93 = sadd.s32 %s92, 1
    %p96 = scmp.eq.s32.totalorder %s11, 1
    %p97 = scmp.ne.s32.totalorder %s92, %s94
    %p98 = scmp.eq.s32.totalorder %s11, 0
    %p99 = por %p97, %p98
    %p100 = scmp.ne.s32.totalorder %s92, %s94
    %p101 = scmp.eq.s32.totalorder %s16, 1
    %p102 = por %p100, %p101
    %p103 = scmp.ne.s32.totalorder %s94, %s95
    %p104 = scmp.eq.s32.totalorder %s16, 0
    %p105 = por %p103, %p104
    %p106 = scmp.ne.s32.totalorder %s94, %s95
    %p107 = scmp.eq.s32.totalorder %s17, 1
    %p108 = por %p106, %p107
    %p110 = scmp.ne.s32.totalorder %s95, %s109
    %p111 = scmp.eq.s32.totalorder %s17, 0
    %p112 = por %p110, %p111
    %s114 = sadd.s32 %s113, 1
    %p117 = scmp.eq.s32.totalorder %s11, 1
    %p118 = scmp.ne.s32.totalorder %s113, %s115
    %p119 = scmp.eq.s32.totalorder %s11, 0
    %p120 = por %p118, %p119
    %p121 = scmp.ne.s32.totalorder %s113, %s115
    %p122 = scmp.eq.s32.totalorder %s16, 1
    %p123 = por %p121, %p122
    %p124 = scmp.ne.s32.totalorder %s115, %s116
    %p125 = scmp.eq.s32.totalorder %s16, 0
    %p126 = por %p124, %p125
    %p127 = scmp.ne.s32.totalorder %s115, %s116
    %p128 = scmp.eq.s32.totalorder %s17, 1
    %p129 = por %p127, %p128
    %p131 = scmp.ne.s32.totalorder %s116, %s130
    %p132 = scmp.eq.s32.totalorder %s17, 0
    %p133 = por %p131, %p132
    %s134 = ssub.s32 %s11, %s18
    %p135 = scmp.eq.s32.totalorder %s134, 0
    %s137 = sadd.s32 %s136, 1
    %s138 = scalar_select %p135, %s136, %s137
    %p141 = pneg %p135
    %p142 = scmp.eq.s32.totalorder %s11, 1
    %p143 = por %p141, %p142
    %p144 = scmp.ne.s32.totalorder %s136, %s139
    %p145 = scmp.eq.s32.totalorder %s11, 0
    %p146 = por %p144, %p145
    %p147 = scmp.ne.s32.totalorder %s136, %s139
    %p148 = scmp.eq.s32.totalorder %s16, 1
    %p149 = por %p147, %p148
    %p150 = scmp.ne.s32.totalorder %s139, %s140
    %p151 = scmp.eq.s32.totalorder %s16, 0
    %p152 = por %p150, %p151
    %p153 = scmp.ne.s32.totalorder %s139, %s140
    %p154 = scmp.eq.s32.totalorder %s17, 1
    %p155 = por %p153, %p154
    %p157 = scmp.ne.s32.totalorder %s140, %s156
    %p158 = scmp.eq.s32.totalorder %s17, 0
    %p159 = por %p157, %p158
    %p160 = scmp.le.s32.totalorder 1, %s11
    %p161 = scmp.lt.s32.totalorder %s11, 3
    %p162 = pnand %p160, %p161
    %p163 = pneg %p162
    // Predicated region
    $region9: #{block2d_forward.1} parent=5 // pred_check
      _
    $region10: #{block2d_forward.1} parent=5 // pred_check_branch
      %165 = sbr.rel (%p162) target = $region12
    $region11: #{block2d_forward.1} parent=5 // pred_region
      %s166 = ssub.s32 %s11, 1
      // Predicated region
      $region13: #{block2d_forward.1} parent=11 // pred_check
        %p167 = pneg %p84
      $region14: #{block2d_forward.1} parent=11 // pred_check_branch
        %169 = sbr.rel (%p167) target = $region16
      $region15: #{block2d_forward.1} parent=11 // pred_region
        _
      $region16: #{block2d_forward.1} parent=11 // pred_fallthru
        _
      // Predicated region
      $region17: #{block2d_forward.1} parent=11 // pred_check
        %p170 = pneg %p105
      $region18: #{block2d_forward.1} parent=11 // pred_check_branch
        %172 = sbr.rel (%p170) target = $region20
      $region19: #{block2d_forward.1} parent=11 // pred_region
        _
      $region20: #{block2d_forward.1} parent=11 // pred_fallthru
        _
      // Predicated region
      $region21: #{block2d_forward.1} parent=11 // pred_check
        %p173 = pneg %p126
      $region22: #{block2d_forward.1} parent=11 // pred_check_branch
        %175 = sbr.rel (%p173) target = $region24
      $region23: #{block2d_forward.1} parent=11 // pred_region
        _
      $region24: #{block2d_forward.1} parent=11 // pred_fallthru
        _
    $region12: #{block2d_forward.1} parent=5 // pred_fallthru
      _
    %p176 = scmp.lt.s32.totalorder %s11, 2
    // Predicated region
    $region25: #{block2d_forward.1} parent=5 // pred_check
      %p177 = pneg %p176
    $region26: #{block2d_forward.1} parent=5 // pred_check_branch
      %179 = sbr.rel (%p177) target = $region28
    $region27: #{block2d_forward.1} parent=5 // pred_region
      // Predicated region
      $region29: #{block2d_forward.1} parent=27 // pred_check
        %p180 = pneg %p31
      $region30: #{block2d_forward.1} parent=27 // pred_check_branch
        %182 = sbr.rel (%p180) target = $region32
      $region31: #{block2d_forward.1} parent=27 // pred_region
        %p183 = scmp.lt.s32.totalorder %s11, 1
        %s184 = scalar_select %p183, %s11, 1
        %s185 = smul.addr %s184, 2
        %s186 = smul.addr %s185, 4
        %s187 = scalar_lea.vmem %s0, %s186
      $region32: #{block2d_forward.1} parent=27 // pred_fallthru
        _
      // Predicated region
      $region33: #{block2d_forward.1} parent=27 // pred_check
        %p188 = pneg %p57
      $region34: #{block2d_forward.1} parent=27 // pred_check_branch
        %190 = sbr.rel (%p188) target = $region36
      $region35: #{block2d_forward.1} parent=27 // pred_region
        %p191 = scmp.lt.s32.totalorder %s11, 1
        %s192 = scalar_select %p191, %s11, 1
        %s193 = smul.addr %s192, 2
        %s194 = smul.addr %s193, 8
        %s195 = scalar_lea.vmem %s1, %s194
      $region36: #{block2d_forward.1} parent=27 // pred_fallthru
        _
    $region28: #{block2d_forward.1} parent=5 // pred_fallthru
      _
    %p196 = scmp.le.s32.totalorder 1, %s11
    %p197 = scmp.lt.s32.totalorder %s11, 3
    %p198 = pnand %p196, %p197
    %p199 = pneg %p198
    // Predicated region
    $region37: #{block2d_forward.1} parent=5 // pred_check
      _
    $region38: #{block2d_forward.1} parent=5 // pred_check_branch
      %201 = sbr.rel (%p198) target = $region40
    $region39: #{block2d_forward.1} parent=5 // pred_region
      %s202 = ssub.s32 %s11, 1
      %p203 = scmp.lt.s32.totalorder %s16, 1
      %s204 = scalar_select %p203, %s16, 1
      %s205 = smul.addr %s204, 2
      %s206 = smul.addr %s205, 4
      %s207 = scalar_lea.vmem %s0, %s206
      %p208 = pneg %p37
      %p209 = pneg %p34
      %p210 = scmp.lt.s32.totalorder %s16, 1
      %s211 = scalar_select %p210, %s16, 1
      %s212 = smul.addr %s211, 2
      %s213 = smul.addr %s212, 8
      %s214 = scalar_lea.vmem %s1, %s213
      %p215 = pneg %p63
      %p216 = pneg %p60
      %p217 = pneg %p84
      %p218 = pneg %p81
      %p219 = pneg %p105
      %p220 = pneg %p102
      %p221 = pneg %p126
      %p222 = pneg %p123
      %p223 = pneg %p152
      %p224 = pneg %p149
      %p225 = scmp.lt.s32.totalorder %s16, 1
      %s226 = scalar_select %p225, %s16, 1
      %s227 = smul.addr %s226, 2
      %s228 = smul.addr %s227, 8
      %s229 = scalar_lea.vmem %s5, %s228
      %p230 = scmp.lt.s32.totalorder %s16, 1
      %s231 = scalar_select %p230, %s16, 1
      %s232 = smul.addr %s231, 2
      %s233 = smul.addr %s232, 4
      %s234 = scalar_lea.vmem %s0, %s233
      %p235 = scmp.lt.s32.totalorder %s16, 1
      %s236 = scalar_select %p235, %s16, 1
      %s237 = smul.addr %s236, 2
      %s238 = smul.addr %s237, 8
      %s239 = scalar_lea.vmem %s1, %s238
      %p240 = scmp.lt.s32.totalorder %s16, 1
      %s241 = scalar_select %p240, %s16, 1
      %s242 = smul.addr %s241, 2
      %s243 = smul.addr %s242, 8
      %s244 = scalar_lea.vmem %s5, %s243
      %v246 = vld [vmem:[%s234] sm:$0xff]
      %v247 = vlaneseq
      %v248 = vand.u32 %v247, 127
      %v249 = vadd.s32 %v248, 128
      %v250 = vand.u32 %v248, 15
      %v251 = vand.u32 %v249, 15
      %vm252 = vcmp.eq.s32.totalorder %v250, 0
      %vm253 = vcmp.eq.s32.totalorder %v251, 0
      %vm254 = vcmp.eq.s32.totalorder %v250, 15
      %vm255 = vcmp.eq.s32.totalorder %v251, 15
      %vm256 = vcmp.lt.s32.totalorder %v248, 16
      %vm257 = vcmp.lt.s32.totalorder %v249, 16
      %vm258 = vcmp.ge.s32.totalorder %v248, 240
      %vm259 = vcmp.ge.s32.totalorder %v249, 240
      %v260 = vmul.f32 %v246, %v246
      %v262 = vcombine.high %v260, %v260
      %vm264 = vcmask 1043456
      %v265 = vsel %vm264, %v260, 0.0
      %v266 = vrot.slane %v265, 4
      %v267 = vadd.f32 %v265, %v266
      %v268 = vrot.slane %v267, 2
      %v269 = vadd.f32 %v267, %v268
      %v270 = vrot.slane %v269, 1
      %v271 = vadd.f32 %v269, %v270
      %v272 = vsel %vm264, %v262, 0.0
      %v273 = vrot.slane %v272, 4
      %v274 = vadd.f32 %v272, %v273
      %v275 = vrot.slane %v274, 2
      %v276 = vadd.f32 %v274, %v275
      %v277 = vrot.slane %v276, 1
      %v278 = vadd.f32 %v276, %v277
      %v279 = vrsqrt.pop %v271
      %v280 = vmul.f32 %v271, %v279
      %vm281 = vcmp.eq.f32.partialorder %v271, inf
      %v282 = vsel %vm281, %v271, %v280
      %vm283 = vcmp.eq.f32.partialorder %v271, 0.0
      %v284 = vand.u32 %v271, 2147483648
      %v285 = vsel %vm283, %v284, %v282
      %v286 = vrsqrt.pop %v278
      %v287 = vmul.f32 %v278, %v286
      %vm288 = vcmp.eq.f32.partialorder %v278, inf
      %v289 = vsel %vm288, %v278, %v287
      %vm290 = vcmp.eq.f32.partialorder %v278, 0.0
      %v291 = vand.u32 %v278, 2147483648
      %v292 = vsel %vm290, %v291, %v289
      %v293 = vmul.f32 %v285, 0.5
      %v294 = vmul.f32 %v292, 0.5
      %v295 = vadd.f32 %v293, 0.0001
      %v296 = vadd.f32 %v294, 0.0001
      %v297 = vrcp.pop %v295
      %v298 = vrcp.pop %v296
      %v301 = vcombine.low %v297, %v298
      %v303 = vmul.f32 %v246, %v301
      %v304 = vmul.f32 %v303, 0.5
      %v305 = vtanh.pop %v304
      %v306 = vmul.f32 %v305, 0.5
      %v307 = vadd.f32 %v306, 0.5
      %v308 = vmul.f32 %v303, %v307
      %v309 = vmul.f32 %v308, 1.6778524
      %v311 = vcombine.high %v309, %v309
      %313 = vrot.lane.b32.xlu0 %v309, 1
      %v314 = vpop.permute.xlu0 %313
      %315 = vrot.lane.b32.xlu0 %v311, 1
      %v316 = vpop.permute.xlu0 %315
      %vm317 = vcmp.lt.s32.totalorder %v248, 1
      %v318 = vsel %vm317, %v314, %v316
      %v319 = vsel %vm317, %v316, %v314
      %320 = vrot.lane.b32.xlu0 %v309, 127
      %v321 = vpop.permute.xlu0 %320
      %322 = vrot.lane.b32.xlu0 %v311, 127
      %v323 = vpop.permute.xlu0 %322
      %vm324 = vcmp.lt.s32.totalorder %v248, 127
      %v325 = vsel %vm324, %v321, %v323
      %v326 = vsel %vm324, %v323, %v321
      %v327 = vsel %vm252, 1, 0
      %v328 = vsel %vm253, 1, 0
      %vm329 = vcmp.eq.s32.totalorder %v327, 1
      %vm330 = vcmp.eq.s32.totalorder %v328, 1
      %v331 = vsel %vm329, %v325, %v319
      %v332 = vsel %vm330, %v326, %v318
      %v333 = vsel %vm254, 1, 0
      %v334 = vsel %vm255, 1, 0
      %vm335 = vcmp.eq.s32.totalorder %v333, 1
      %vm336 = vcmp.eq.s32.totalorder %v334, 1
      %v337 = vsel %vm335, %v319, %v325
      %v338 = vsel %vm336, %v318, %v326
      %339 = vrot.lane.b32.xlu0 %v331, 16
      %v340 = vpop.permute.xlu0 %339
      %341 = vrot.lane.b32.xlu0 %v332, 16
      %v342 = vpop.permute.xlu0 %341
      %v343 = vsel %vm256, %v340, %v342
      %v344 = vsel %vm256, %v342, %v340
      %v345 = vsel %vm256, 1, 0
      %v346 = vsel %vm257, 1, 0
      %vm347 = vcmp.eq.s32.totalorder %v345, 1
      %vm348 = vcmp.eq.s32.totalorder %v346, 1
      %v349 = vsel %vm347, 0.0, %v344
      %v350 = vsel %vm348, 0.0, %v343
      %351 = vrot.lane.b32.xlu0 %v309, 16
      %v352 = vpop.permute.xlu0 %351
      %353 = vrot.lane.b32.xlu0 %v311, 16
      %v354 = vpop.permute.xlu0 %353
      %v355 = vsel %vm256, %v352, %v354
      %v356 = vsel %vm256, %v354, %v352
      %v357 = vsel %vm347, 0.0, %v356
      %v358 = vsel %vm348, 0.0, %v355
      %359 = vrot.lane.b32.xlu0 %v337, 16
      %v360 = vpop.permute.xlu0 %359
      %361 = vrot.lane.b32.xlu0 %v338, 16
      %v362 = vpop.permute.xlu0 %361
      %v363 = vsel %vm256, %v360, %v362
      %v364 = vsel %vm256, %v362, %v360
      %v365 = vsel %vm347, 0.0, %v364
      %v366 = vsel %vm348, 0.0, %v363
      %367 = vrot.lane.b32.xlu0 %v331, 112
      %v368 = vpop.permute.xlu0 %367
      %369 = vrot.lane.b32.xlu0 %v332, 112
      %v370 = vpop.permute.xlu0 %369
      %vm371 = vcmp.lt.s32.totalorder %v248, 112
      %v372 = vsel %vm371, %v368, %v370
      %v373 = vsel %vm371, %v370, %v368
      %v374 = vsel %vm258, 1, 0
      %v375 = vsel %vm259, 1, 0
      %vm376 = vcmp.eq.s32.totalorder %v374, 1
      %vm377 = vcmp.eq.s32.totalorder %v375, 1
      %v378 = vsel %vm376, 0.0, %v372
      %v379 = vsel %vm377, 0.0, %v373
      %380 = vrot.lane.b32.xlu0 %v309, 112
      %v381 = vpop.permute.xlu0 %380
      %382 = vrot.lane.b32.xlu0 %v311, 112
      %v383 = vpop.permute.xlu0 %382
      %v384 = vsel %vm371, %v381, %v383
      %v385 = vsel %vm371, %v383, %v381
      %v386 = vsel %vm376, 0.0, %v384
      %v387 = vsel %vm377, 0.0, %v385
      %388 = vrot.lane.b32.xlu0 %v337, 112
      %v389 = vpop.permute.xlu0 %388
      %390 = vrot.lane.b32.xlu0 %v338, 112
      %v391 = vpop.permute.xlu0 %390
      %v392 = vsel %vm371, %v389, %v391
      %v393 = vsel %vm371, %v391, %v389
      %v394 = vsel %vm376, 0.0, %v392
      %v395 = vsel %vm377, 0.0, %v393
      %v398 = vrot.slane %v357, 4
      %v399 = vrot.slane %v358, 4
      %v404 = vrot.slane %v331, 4
      %v405 = vrot.slane %v332, 4
      %v410 = vrot.slane %v337, 4
      %v411 = vrot.slane %v338, 4
      %v416 = vrot.slane %v386, 4
      %v417 = vrot.slane %v387, 4
      %v420 = vsel %vm264, %v349, %v398
      %v421 = vsel %vm264, %v350, %v399
      %v422 = vsel %vm264, %v365, %v404
      %v423 = vsel %vm264, %v366, %v405
      %v424 = vsel %vm264, %v309, %v410
      %v425 = vsel %vm264, %v311, %v411
      %v426 = vsel %vm264, %v378, %v416
      %v427 = vsel %vm264, %v379, %v417
      %v428 = vld [vmem:[%s2] sm:$0xf]
      %v429 = vld [vmem:[%s2 + $0x4] sm:$0xf]
      %v430 = vpack.c.bf16 %v422, %v420
      %v431 = vpack.c.bf16 %v423, %v421
      %v432 = vpack.c.bf16 %v426, %v424
      %v433 = vpack.c.bf16 %v427, %v425
      %v434 = vpack.c.bf16 %v394, %v394
      %v435 = vpack.c.bf16 %v395, %v395
      %v438 = vunpack.c.l.b16 %v428
      %v439 = vunpack.c.l.b16 %v429
      %v440 = vpack.c.b16 %v439, %v438
      %vm441 = vcmask 293888
      %v443 = vsel %vm441, %v440, 0
      %vm445 = vcmask 1041408
      %v447 = vsel %vm445, %v434, 0
      %v450 = vsel %vm445, %v435, 0
      %452 = vmatprep.subr.bf16.mxu0 %v431
      %453 = vmatpush1.bf16.msra.mxu0 %v430
      %454 = vmatprep.subr.bf16.mxu0 %v433
      %455 = vmatpush1.bf16.msra.mxu0 %v432
      %456 = vmatprep.subr.bf16.mxu0 %v450
      %457 = vmatpush1.bf16.msra.mxu0 %v447
      %458 = vmatprep.subr.bf16.mxu0 0
      %459 = vmatpush1.bf16.msra.mxu0 0
      %460 = vmatprep.subr.bf16.mxu0 0
      %461 = vmatpush1.bf16.msra.mxu0 0
      %462 = vmatprep.subr.bf16.mxu0 0
      %463 = vmatpush1.bf16.msra.mxu0 0
      %464 = vmatprep.subr.bf16.mxu0 0
      %465 = vmatpush1.bf16.msra.mxu0 0
      %466 = vmatprep.subr.bf16.mxu0 0
      %467 = vmatpush1.bf16.msra.mxu0 0
      %468 = vmatprep.subr.bf16.mxu0 0
      %469 = vmatpush1.bf16.msra.mxu0 0
      %470 = vmatprep.subr.bf16.mxu0 0
      %471 = vmatpush1.bf16.msra.mxu0 0
      %472 = vmatprep.subr.bf16.mxu0 0
      %473 = vmatpush1.bf16.msra.mxu0 0
      %474 = vmatprep.subr.bf16.mxu0 0
      %475 = vmatpush1.bf16.msra.mxu0 0
      %476 = vmatprep.subr.bf16.mxu0 0
      %477 = vmatpush1.bf16.msra.mxu0 0
      %478 = vmatprep.subr.bf16.mxu0 0
      %479 = vmatpush1.bf16.msra.mxu0 0
      %480 = vmatprep.subr.bf16.mxu0 0
      %481 = vmatpush1.bf16.msra.mxu0 0
      %482 = vmatprep.subr.bf16.mxu0 0
      %483 = vmatpush1.bf16.msra.mxu0 0
      %484 = vmatprep.mubr.bf16.mxu0 0
      %485 = vmatmul.mubr.bf16.gmra.mrb[0].mxu0 %v443
      %v486 = vpop.f32.mrb[0].mxu0
      %v487 = vadd.f32 0.0, %v486
      %v488 = vpop.f32.mrb[0].mxu0
      %v489 = vadd.f32 0.0, %v488
      %v490 = vpop.f32.mrb[0].mxu0
      %v491 = vadd.f32 0.0, %v490
      %v492 = vpop.f32.mrb[0].mxu0
      %v493 = vadd.f32 0.0, %v492
      %494 = vdwg.mxu0
      %v495 = vld [vmem:[%s239] sm:$0xff]
      %v496 = vld [vmem:[%s239 + $0x8] sm:$0xff]
      %498 = vset.pattern.permute.xlu0 0
      %499 = vperm.xlu0 %498, %v495
      %v500 = vpop.permute.xlu0 %499
      %503 = vset.pattern.permute.xlu0 0
      %504 = vperm.xlu0 %503, %v496
      %v505 = vpop.permute.xlu0 %504
      %v507 = vmul.f32 %v487, %v500
      %v508 = vmul.f32 %v489, %v500
      %v509 = vmul.f32 %v491, %v505
      %v510 = vmul.f32 %v493, %v505
      %v511 = vmul.f32 %v507, 0.5
      %v512 = vmul.f32 %v508, 0.5
      %v513 = vmul.f32 %v509, 0.5
      %v514 = vmul.f32 %v510, 0.5
      %v515 = vtanh.pop %v511
      %v516 = vtanh.pop %v512
      %v517 = vtanh.pop %v513
      %v518 = vtanh.pop %v514
      %v519 = vmul.f32 %v515, 0.5
      %v520 = vmul.f32 %v516, 0.5
      %v521 = vmul.f32 %v517, 0.5
      %v522 = vmul.f32 %v518, 0.5
      %v523 = vadd.f32 %v519, 0.5
      %v524 = vadd.f32 %v520, 0.5
      %v525 = vadd.f32 %v521, 0.5
      %v526 = vadd.f32 %v522, 0.5
      %v527 = vmul.f32 %v507, %v523
      %v528 = vmul.f32 %v508, %v524
      %v529 = vmul.f32 %v509, %v525
      %v530 = vmul.f32 %v510, %v526
      %v531 = vmul.f32 %v527, 1.6778524
      %v532 = vmul.f32 %v528, 1.6778524
      %v533 = vmul.f32 %v529, 1.6778524
      %v534 = vmul.f32 %v530, 1.6778524
      %535 = vrot.lane.b32.xlu0 %v531, 1
      %v536 = vpop.permute.xlu0 %535
      %537 = vrot.lane.b32.xlu0 %v533, 1
      %v538 = vpop.permute.xlu0 %537
      %539 = vrot.lane.b32.xlu0 %v532, 1
      %v540 = vpop.permute.xlu0 %539
      %541 = vrot.lane.b32.xlu0 %v534, 1
      %v542 = vpop.permute.xlu0 %541
      %v543 = vsel %vm317, %v536, %v540
      %v544 = vsel %vm317, %v538, %v542
      %v545 = vsel %vm317, %v540, %v536
      %v546 = vsel %vm317, %v542, %v538
      %547 = vrot.lane.b32.xlu0 %v531, 127
      %v548 = vpop.permute.xlu0 %547
      %549 = vrot.lane.b32.xlu0 %v533, 127
      %v550 = vpop.permute.xlu0 %549
      %551 = vrot.lane.b32.xlu0 %v532, 127
      %v552 = vpop.permute.xlu0 %551
      %553 = vrot.lane.b32.xlu0 %v534, 127
      %v554 = vpop.permute.xlu0 %553
      %v555 = vsel %vm324, %v548, %v552
      %v556 = vsel %vm324, %v550, %v554
      %v557 = vsel %vm324, %v552, %v548
      %v558 = vsel %vm324, %v554, %v550
      %v559 = vsel %vm329, %v555, %v545
      %v560 = vsel %vm330, %v557, %v543
      %v561 = vsel %vm329, %v556, %v546
      %v562 = vsel %vm330, %v558, %v544
      %v563 = vsel %vm335, %v545, %v555
      %v564 = vsel %vm336, %v543, %v557
      %v565 = vsel %vm335, %v546, %v556
      %v566 = vsel %vm336, %v544, %v558
      %567 = vrot.lane.b32.xlu0 %v559, 16
      %v568 = vpop.permute.xlu0 %567
      %569 = vrot.lane.b32.xlu0 %v561, 16
      %v570 = vpop.permute.xlu0 %569
      %571 = vrot.lane.b32.xlu0 %v560, 16
      %v572 = vpop.permute.xlu0 %571
      %573 = vrot.lane.b32.xlu0 %v562, 16
      %v574 = vpop.permute.xlu0 %573
      %v575 = vsel %vm256, %v568, %v572
      %v576 = vsel %vm256, %v570, %v574
      %v577 = vsel %vm256, %v572, %v568
      %v578 = vsel %vm256, %v574, %v570
      %v579 = vsel %vm347, 0.0, %v577
      %v580 = vsel %vm348, 0.0, %v575
      %v581 = vsel %vm347, 0.0, %v578
      %v582 = vsel %vm348, 0.0, %v576
      %583 = vrot.lane.b32.xlu0 %v531, 16
      %v584 = vpop.permute.xlu0 %583
      %585 = vrot.lane.b32.xlu0 %v533, 16
      %v586 = vpop.permute.xlu0 %585
      %587 = vrot.lane.b32.xlu0 %v532, 16
      %v588 = vpop.permute.xlu0 %587
      %589 = vrot.lane.b32.xlu0 %v534, 16
      %v590 = vpop.permute.xlu0 %589
      %v591 = vsel %vm256, %v584, %v588
      %v592 = vsel %vm256, %v586, %v590
      %v593 = vsel %vm256, %v588, %v584
      %v594 = vsel %vm256, %v590, %v586
      %v595 = vsel %vm347, 0.0, %v593
      %v596 = vsel %vm348, 0.0, %v591
      %v597 = vsel %vm347, 0.0, %v594
      %v598 = vsel %vm348, 0.0, %v592
      %599 = vrot.lane.b32.xlu0 %v563, 16
      %v600 = vpop.permute.xlu0 %599
      %601 = vrot.lane.b32.xlu0 %v565, 16
      %v602 = vpop.permute.xlu0 %601
      %603 = vrot.lane.b32.xlu0 %v564, 16
      %v604 = vpop.permute.xlu0 %603
      %605 = vrot.lane.b32.xlu0 %v566, 16
      %v606 = vpop.permute.xlu0 %605
      %v607 = vsel %vm256, %v600, %v604
      %v608 = vsel %vm256, %v602, %v606
      %v609 = vsel %vm256, %v604, %v600
      %v610 = vsel %vm256, %v606, %v602
      %v611 = vsel %vm347, 0.0, %v609
      %v612 = vsel %vm348, 0.0, %v607
      %v613 = vsel %vm347, 0.0, %v610
      %v614 = vsel %vm348, 0.0, %v608
      %615 = vrot.lane.b32.xlu0 %v559, 112
      %v616 = vpop.permute.xlu0 %615
      %617 = vrot.lane.b32.xlu0 %v561, 112
      %v618 = vpop.permute.xlu0 %617
      %619 = vrot.lane.b32.xlu0 %v560, 112
      %v620 = vpop.permute.xlu0 %619
      %621 = vrot.lane.b32.xlu0 %v562, 112
      %v622 = vpop.permute.xlu0 %621
      %v623 = vsel %vm371, %v616, %v620
      %v624 = vsel %vm371, %v618, %v622
      %v625 = vsel %vm371, %v620, %v616
      %v626 = vsel %vm371, %v622, %v618
      %v627 = vsel %vm376, 0.0, %v623
      %v628 = vsel %vm377, 0.0, %v625
      %v629 = vsel %vm376, 0.0, %v624
      %v630 = vsel %vm377, 0.0, %v626
      %631 = vrot.lane.b32.xlu0 %v531, 112
      %v632 = vpop.permute.xlu0 %631
      %633 = vrot.lane.b32.xlu0 %v533, 112
      %v634 = vpop.permute.xlu0 %633
      %635 = vrot.lane.b32.xlu0 %v532, 112
      %v636 = vpop.permute.xlu0 %635
      %637 = vrot.lane.b32.xlu0 %v534, 112
      %v638 = vpop.permute.xlu0 %637
      %v639 = vsel %vm371, %v632, %v636
      %v640 = vsel %vm371, %v634, %v638
      %v641 = vsel %vm371, %v636, %v632
      %v642 = vsel %vm371, %v638, %v634
      %v643 = vsel %vm376, 0.0, %v639
      %v644 = vsel %vm377, 0.0, %v641
      %v645 = vsel %vm376, 0.0, %v640
      %v646 = vsel %vm377, 0.0, %v642
      %647 = vrot.lane.b32.xlu0 %v563, 112
      %v648 = vpop.permute.xlu0 %647
      %649 = vrot.lane.b32.xlu0 %v565, 112
      %v650 = vpop.permute.xlu0 %649
      %651 = vrot.lane.b32.xlu0 %v564, 112
      %v652 = vpop.permute.xlu0 %651
      %653 = vrot.lane.b32.xlu0 %v566, 112
      %v654 = vpop.permute.xlu0 %653
      %v655 = vsel %vm371, %v648, %v652
      %v656 = vsel %vm371, %v650, %v654
      %v657 = vsel %vm371, %v652, %v648
      %v658 = vsel %vm371, %v654, %v650
      %v659 = vsel %vm376, 0.0, %v655
      %v660 = vsel %vm377, 0.0, %v657
      %v661 = vsel %vm376, 0.0, %v656
      %v662 = vsel %vm377, 0.0, %v658
      %v663 = vld [vmem:[%s3] sm:$0xff]
      %v664 = vpack.c.bf16 %v581, %v579
      %v665 = vpack.c.bf16 %v582, %v580
      %v666 = vpack.c.bf16 %v597, %v595
      %v667 = vpack.c.bf16 %v598, %v596
      %v668 = vpack.c.bf16 %v613, %v611
      %v669 = vpack.c.bf16 %v614, %v612
      %v670 = vpack.c.bf16 %v561, %v559
      %v671 = vpack.c.bf16 %v562, %v560
      %v672 = vpack.c.bf16 %v533, %v531
      %v673 = vpack.c.bf16 %v534, %v532
      %v674 = vpack.c.bf16 %v565, %v563
      %v675 = vpack.c.bf16 %v566, %v564
      %v676 = vpack.c.bf16 %v629, %v627
      %v677 = vpack.c.bf16 %v630, %v628
      %v678 = vpack.c.bf16 %v645, %v643
      %v679 = vpack.c.bf16 %v646, %v644
      %v680 = vpack.c.bf16 %v661, %v659
      %v681 = vpack.c.bf16 %v662, %v660
      %v683 = vunpack.c.l.b16 %v663
      %v684 = vunpack.c.h.b16 %v663
      %v685 = vpack.c.b16 %v683, %v683
      %v686 = vpack.c.b16 %v684, %v684
      %vm688 = vcmask 130048
      %v690 = vsel %vm688, %v686, 0
      %692 = vmatprep.subr.bf16.mxu0 %v665
      %693 = vmatpush1.bf16.msra.mxu0 %v664
      %694 = vmatprep.subr.bf16.mxu0 %v667
      %695 = vmatpush1.bf16.msra.mxu0 %v666
      %696 = vmatprep.subr.bf16.mxu0 %v669
      %697 = vmatpush1.bf16.msra.mxu0 %v668
      %698 = vmatprep.subr.bf16.mxu0 %v671
      %699 = vmatpush1.bf16.msra.mxu0 %v670
      %700 = vmatprep.subr.bf16.mxu0 %v673
      %701 = vmatpush1.bf16.msra.mxu0 %v672
      %702 = vmatprep.subr.bf16.mxu0 %v675
      %703 = vmatpush1.bf16.msra.mxu0 %v674
      %704 = vmatprep.subr.bf16.mxu0 %v677
      %705 = vmatpush1.bf16.msra.mxu0 %v676
      %706 = vmatprep.subr.bf16.mxu0 %v679
      %707 = vmatpush1.bf16.msra.mxu0 %v678
      %708 = vmatprep.subr.bf16.mxu0 %v681
      %709 = vmatpush1.bf16.msra.mxu0 %v680
      %710 = vmatprep.subr.bf16.mxu0 0
      %711 = vmatpush1.bf16.msra.mxu0 0
      %712 = vmatprep.subr.bf16.mxu0 0
      %713 = vmatpush1.bf16.msra.mxu0 0
      %714 = vmatprep.subr.bf16.mxu0 0
      %715 = vmatpush1.bf16.msra.mxu0 0
      %716 = vmatprep.subr.bf16.mxu0 0
      %717 = vmatpush1.bf16.msra.mxu0 0
      %718 = vmatprep.subr.bf16.mxu0 0
      %719 = vmatpush1.bf16.msra.mxu0 0
      %720 = vmatprep.subr.bf16.mxu0 0
      %721 = vmatpush1.bf16.msra.mxu0 0
      %722 = vmatprep.subr.bf16.mxu0 0
      %723 = vmatpush1.bf16.msra.mxu0 0
      %724 = vmatprep.mubr.bf16.mxu0 %v690
      %725 = vmatmul.mubr.bf16.gmra.mrb[0].mxu0 %v685
      %v726 = vpop.f32.mrb[0].mxu0
      %v727 = vadd.f32 0.0, %v726
      %v728 = vpop.f32.mrb[0].mxu0
      %v729 = vadd.f32 0.0, %v728
      %v730 = vpop.f32.mrb[0].mxu0
      %v731 = vpop.f32.mrb[0].mxu0
      %732 = vdwg.mxu0
      %v733 = vld [vmem:[%s4] sm:$0xf]
      %v735 = vcombine.high %v303, %v303
      %v737 = vpack.c.bf16 %v303, %v303
      %v738 = vpack.c.bf16 %v735, %v735
      %vm739 = vcmask 31744
      %v741 = vsel %vm739, %v733, 0
      %v744 = vsel %vm445, %v737, 0
      %v747 = vsel %vm445, %v738, 0
      %749 = vmatprep.subr.bf16.mxu0 %v747
      %750 = vmatpush1.bf16.msra.mxu0 %v744
      %751 = vmatprep.subr.bf16.mxu0 0
      %752 = vmatpush1.bf16.msra.mxu0 0
      %753 = vmatprep.subr.bf16.mxu0 0
      %754 = vmatpush1.bf16.msra.mxu0 0
      %755 = vmatprep.subr.bf16.mxu0 0
      %756 = vmatpush1.bf16.msra.mxu0 0
      %757 = vmatprep.subr.bf16.mxu0 0
      %758 = vmatpush1.bf16.msra.mxu0 0
      %759 = vmatprep.subr.bf16.mxu0 0
      %760 = vmatpush1.bf16.msra.mxu0 0
      %761 = vmatprep.subr.bf16.mxu0 0
      %762 = vmatpush1.bf16.msra.mxu0 0
      %763 = vmatprep.subr.bf16.mxu0 0
      %764 = vmatpush1.bf16.msra.mxu0 0
      %765 = vmatprep.subr.bf16.mxu0 0
      %766 = vmatpush1.bf16.msra.mxu0 0
      %767 = vmatprep.subr.bf16.mxu0 0
      %768 = vmatpush1.bf16.msra.mxu0 0
      %769 = vmatprep.subr.bf16.mxu0 0
      %770 = vmatpush1.bf16.msra.mxu0 0
      %771 = vmatprep.subr.bf16.mxu0 0
      %772 = vmatpush1.bf16.msra.mxu0 0
      %773 = vmatprep.subr.bf16.mxu0 0
      %774 = vmatpush1.bf16.msra.mxu0 0
      %775 = vmatprep.subr.bf16.mxu0 0
      %776 = vmatpush1.bf16.msra.mxu0 0
      %777 = vmatprep.subr.bf16.mxu0 0
      %778 = vmatpush1.bf16.msra.mxu0 0
      %779 = vmatprep.subr.bf16.mxu0 0
      %780 = vmatpush1.bf16.msra.mxu0 0
      %781 = vmatprep.mubr.bf16.mxu0 0
      %782 = vmatmul.mubr.bf16.gmra.mrb[0].mxu0 %v741
      %v783 = vpop.f32.mrb[0].mxu0
      %v784 = vadd.f32 0.0, %v783
      %v785 = vpop.f32.mrb[0].mxu0
      %v786 = vadd.f32 0.0, %v785
      %v787 = vpop.f32.mrb[0].mxu0
      %v788 = vpop.f32.mrb[0].mxu0
      %789 = vdwg.mxu0
      %v790 = vmul.f32 %v784, 0.7
      %v791 = vmul.f32 %v786, 0.7
      %v792 = vmul.f32 %v727, 0.3
      %v793 = vmul.f32 %v729, 0.3
      %v794 = vadd.f32 %v790, %v792
      %v795 = vadd.f32 %v791, %v793
      %v796 = vmul.f32 %v794, 1.3130643
      %v797 = vmul.f32 %v795, 1.3130643
      %v798 = vmax.f32 %v796, -256.0
      %v799 = vmax.f32 %v797, -256.0
      %v800 = vmin.f32 %v798, 256.0
      %v801 = vmin.f32 %v799, 256.0
      %802 = vst [vmem:[%s244] sm:$0xff] %v800
      %803 = vst [vmem:[%s244 + $0x8] sm:$0xff] %v801
      %p804 = scmp.lt.s32.totalorder %s16, 1
      %s805 = scalar_select %p804, %s16, 1
      %s806 = smul.addr %s805, 2
      %s807 = smul.addr %s806, 8
      %s808 = scalar_lea.vmem %s5, %s807
      // Predicated region
      $region41: #{block2d_forward.1} parent=39 // pred_check
        %p809 = pneg %p149
      $region42: #{block2d_forward.1} parent=39 // pred_check_branch
        %811 = sbr.rel (%p809) target = $region44
      $region43: #{block2d_forward.1} parent=39 // pred_region
        _
      $region44: #{block2d_forward.1} parent=39 // pred_fallthru
        _
    $region40: #{block2d_forward.1} parent=5 // pred_fallthru
      _
    %p812 = scmp.le.s32.totalorder 2, %s11
    // Predicated region
    $region45: #{block2d_forward.1} parent=5 // pred_check
      %p813 = pneg %p812
    $region46: #{block2d_forward.1} parent=5 // pred_check_branch
      %815 = sbr.rel (%p813) target = $region48
    $region47: #{block2d_forward.1} parent=5 // pred_region
      %s816 = ssub.s32 %s11, 2
      // Predicated region
      $region49: #{block2d_forward.1} parent=47 // pred_check
        %p817 = pneg %p155
      $region50: #{block2d_forward.1} parent=47 // pred_check_branch
        %819 = sbr.rel (%p817) target = $region52
      $region51: #{block2d_forward.1} parent=47 // pred_region
        %p820 = scmp.lt.s32.totalorder %s17, 1
        %s821 = scalar_select %p820, %s17, 1
        %s822 = smul.addr %s821, 2
        %s823 = smul.addr %s822, 8
        %s824 = scalar_lea.vmem %s5, %s823
      $region52: #{block2d_forward.1} parent=47 // pred_fallthru
        _
    $region48: #{block2d_forward.1} parent=5 // pred_fallthru
      _
  $region6: #{block2d_forward.1} parent=0 // loop_footer
    %s15 = sadd.s32 1, %s11
  $region7: #{block2d_forward.1} parent=0 // loop_footer_branch
    %10 = sbr.rel target = $region3
  $region8: #{block2d_forward.1} parent=0 // loop_exit
    _

</llo_original>
